<compile_context>
chip_gen: v6e
topology: v6e:2x2x1
jax: 0.10.0
libtpu: 0.0.40
codegen_flags: <defaults>
</compile_context>

<pallas_src>
import jax
import jax.numpy as jnp
from jax.experimental import pallas as pl
from jax.experimental.pallas import tpu as pltpu


def _rope_kernel_full(pos_ref, inv_ref, cos_ref, sin_ref):
    """Full-width path (half < 128 lanes): inv_ref already holds
    concat(inv_freq, inv_freq), so every VPU / trig op is lane-dense and each
    output is written with a single unmasked full-width store."""
    pos = pos_ref[0]                      # [tS, 1]   f32 (sublane-major)
    inv = inv_ref[...]                    # [1, dim]  f32
    emb = pos * inv                       # pure broadcast multiply on the VPU
    cos_ref[...] = jnp.cos(emb).astype(cos_ref.dtype)[None]
    sin_ref[...] = jnp.sin(emb).astype(sin_ref.dtype)[None]


def _rope_kernel_half(pos_ref, inv_ref, cos_ref, sin_ref):
    """Half-width path (half is a multiple of 128): trig on [tS, half] only
    (genuinely halves the vector work), then two lane-aligned unmasked
    sub-stores duplicate the result (no concat temp, no relayout)."""
    half = inv_ref.shape[-1]
    pos = pos_ref[0]                      # [tS, 1]    f32
    inv = inv_ref[...]                    # [1, half]  f32
    freqs = pos * inv                     # [tS, half]
    cos_half = jnp.cos(freqs).astype(cos_ref.dtype)
    sin_half = jnp.sin(freqs).astype(sin_ref.dtype)
    cos_ref[0, :, :half] = cos_half
    cos_ref[0, :, half:] = cos_half
    sin_ref[0, :, :half] = sin_half
    sin_ref[0, :, half:] = sin_half


def _pick_seq_tile(S, dim, out_itemsize, B):
    """Largest sequence tile subject to an ~8 MiB budget for the
    double-buffered cos+sin output blocks (leaves headroom for in-kernel
    intermediates under the 32 MiB scoped-VMEM limit on every generation)."""
    budget = 8 * 1024 * 1024
    cap = budget // (4 * dim * out_itemsize)      # 2 outputs x 2 buffers
    cap = max(256, min(cap, 8192))
    if S <= cap:
        tS = S
        # v7x has 2 TensorCores; a single-step grid (B == 1, one seq tile)
        # would serialize onto one of them. Split once when worthwhile.
        if B == 1 and S >= 512:
            tS = -(-S // 2)
    else:
        tS = cap
    # Round up to a multiple of 16 (bf16 sublane packing / (8,128) rule);
    # the cdiv grid pads + masks the tail tile, so rounding up is safe.
    if tS != S and tS % 16:
        tS = -(-tS // 16) * 16
    return tS


def llama_rotary_embedding(x, position_ids, dim, base=10000.0):
    """Returns (cos, sin), each of shape [B, S, dim] with dtype x.dtype."""
    B, S = position_ids.shape
    half = dim // 2
    out_dtype = x.dtype
    itemsize = jnp.dtype(out_dtype).itemsize

    # Deterministic "buffer" setup (same formula as the nn.Module __init__).
    inv_freq = 1.0 / (base ** (jnp.arange(0, dim, 2, dtype=jnp.float32) / dim))

    # Lane-density decision:
    #  * half < 128 (e.g. head_dim=128 -> half=64): half-width intermediates
    #    sit in half-empty vregs and duplication costs a relayout -> duplicate
    #    inv_freq once on the host and run fully lane-dense.
    #  * half a multiple of 128 (dim >= 256): half-width trig halves the
    #    vector work; duplicate via two lane-aligned sub-stores.
    use_half = (half >= 128) and (half % 128 == 0)
    if use_half:
        kernel = _rope_kernel_half
        inv_arg = inv_freq.reshape(1, half)
    else:
        kernel = _rope_kernel_full
        inv_arg = jnp.concatenate([inv_freq, inv_freq]).reshape(1, dim)

    # Sublane-major positions: [B, S, 1] f32 -> pos[:,None]*inv[None,:] is a
    # pure VPU broadcast multiply (no lane->sublane XLU relayout).
    pos_f32 = position_ids.astype(jnp.float32).reshape(B, S, 1)

    tS = _pick_seq_tile(S, dim, itemsize, B)
    n_s = pl.cdiv(S, tS)

    out_shape = (
        jax.ShapeDtypeStruct((B, S, dim), out_dtype),
        jax.ShapeDtypeStruct((B, S, dim), out_dtype),
    )

    cost = pl.CostEstimate(
        flops=B * S * (half if use_half else dim),
        transcendentals=2 * B * S * (half if use_half else dim),
        bytes_accessed=2 * B * S * dim * itemsize + B * S * 4,
    )

    # TODO(synk): if the RoPE-apply consumer can slice, emitting half-width
    # (or cos|sin-packed) tables would halve HBM write traffic -- the single
    # biggest remaining lever on v5e/v6e for this write-bound kernel.
    cos, sin = pl.pallas_call(
        kernel,
        out_shape=out_shape,
        grid_spec=pltpu.PrefetchScalarGridSpec(
            num_scalar_prefetch=0,
            grid=(B, n_s),
            in_specs=[
                pl.BlockSpec((1, tS, 1), lambda b, s: (b, s, 0)),    # positions
                pl.BlockSpec(inv_arg.shape, lambda b, s: (0, 0)),    # inv freq
            ],
            out_specs=[
                pl.BlockSpec((1, tS, dim), lambda b, s: (b, s, 0)),  # cos
                pl.BlockSpec((1, tS, dim), lambda b, s: (b, s, 0)),  # sin
            ],
        ),
        compiler_params=pltpu.CompilerParams(
            dimension_semantics=("parallel", "parallel"),
            vmem_limit_bytes=32 * 1024 * 1024,   # raise v5e's 16 MiB default
        ),
        cost_estimate=cost,
    )(pos_f32, inv_arg)

    return cos, sin


def _reference(x, position_ids, dim, base=10000.0):
    inv_freq = 1.0 / (base ** (jnp.arange(0, dim, 2, dtype=jnp.float32) / dim))
    freqs = position_ids.astype(jnp.float32)[:, :, None] * inv_freq[None, None, :]
    emb = jnp.concatenate([freqs, freqs], axis=-1)
    return jnp.cos(emb).astype(x.dtype), jnp.sin(emb).astype(x.dtype)


if __name__ == "__main__":
    key = jax.random.PRNGKey(0)

    # 1) Primary small-shape test (module-consistent shapes, f32 outputs,
    #    full-width lane-dense path).
    B, S, dim = 2, 8, 32
    kx, kp = jax.random.split(key)
    x = jax.random.normal(kx, (B, S, dim), dtype=jnp.float32)   # only dtype used
    position_ids = jnp.broadcast_to(
        jnp.arange(S, dtype=jnp.int32)[None, :], (B, S))

    cos, sin = llama_rotary_embedding(x, position_ids, dim)
    cos = jax.block_until_ready(cos)
    sin = jax.block_until_ready(sin)

    cos_ref, sin_ref = _reference(x, position_ids, dim)
    assert cos.shape == (B, S, dim) and sin.shape == (B, S, dim)
    assert cos.dtype == x.dtype and sin.dtype == x.dtype
    assert jnp.allclose(cos, cos_ref, atol=1e-5, rtol=1e-5)
    assert jnp.allclose(sin, sin_ref, atol=1e-5, rtol=1e-5)

    # 2) Production-representative head_dim=128, bf16 outputs, B==1 (exercises
    #    the megacore split so the grid keeps >= 2 parallel steps).
    B2, S2, dim2 = 1, 2048, 128
    x2 = jnp.zeros((B2, S2, dim2), dtype=jnp.bfloat16)
    pos2 = jnp.broadcast_to(jnp.arange(S2, dtype=jnp.int32)[None, :], (B2, S2))
    cos2, sin2 = llama_rotary_embedding(x2, pos2, dim2)
    cos2 = jax.block_until_ready(cos2)
    sin2 = jax.block_until_ready(sin2)
    cos2_ref, sin2_ref = _reference(x2, pos2, dim2)
    assert cos2.dtype == jnp.bfloat16 and sin2.dtype == jnp.bfloat16
    assert jnp.allclose(cos2.astype(jnp.float32), cos2_ref.astype(jnp.float32),
                        atol=1e-2, rtol=1e-2)
    assert jnp.allclose(sin2.astype(jnp.float32), sin2_ref.astype(jnp.float32),
                        atol=1e-2, rtol=1e-2)

    # 3) dim=256 (half-width sub-store path) with a poorly-factorable S to
    #    exercise the cdiv grid / masked partial last tile.
    B3, S3, dim3 = 1, 1040, 256
    x3 = jnp.zeros((B3, S3, dim3), dtype=jnp.bfloat16)
    pos3 = jnp.broadcast_to(jnp.arange(S3, dtype=jnp.int32)[None, :], (B3, S3))
    cos3, sin3 = llama_rotary_embedding(x3, pos3, dim3)
    cos3 = jax.block_until_ready(cos3)
    sin3 = jax.block_until_ready(sin3)
    cos3_ref, sin3_ref = _reference(x3, pos3, dim3)
    assert jnp.allclose(cos3.astype(jnp.float32), cos3_ref.astype(jnp.float32),
                        atol=1e-2, rtol=1e-2)
    assert jnp.allclose(sin3.astype(jnp.float32), sin3_ref.astype(jnp.float32),
                        atol=1e-2, rtol=1e-2)

    print("KERNEL_OK")
</pallas_src>

<mosaic_0001>
module attributes {stable_mosaic.version = 11 : i64} {
  func.func @_rope_kernel_full(%arg0: i32, %arg1: i32, %arg2: memref<1x8x1xf32, #tpu.memory_space<vmem>>, %arg3: memref<1x32xf32, #tpu.memory_space<vmem>>, %arg4: memref<1x8x32xf32, #tpu.memory_space<vmem>>, %arg5: memref<1x8x32xf32, #tpu.memory_space<vmem>>) attributes {dimension_semantics = [#tpu.dimension_semantics<parallel>, #tpu.dimension_semantics<parallel>], iteration_bounds = array<i64: 2, 1>, scalar_prefetch = 0 : i64, scratch_operands = 0 : i64, tpu.core_type = #tpu.core_type<tc>, window_params = [{transform_indices = @transform_0, window_bounds = array<i64: 1, 8, 1>}, {pipeline_mode = #tpu.pipeline_mode<synchronous>, transform_indices = @transform_1, window_bounds = array<i64: 1, 32>}, {transform_indices = @transform_2, window_bounds = array<i64: 1, 8, 32>}, {transform_indices = @transform_3, window_bounds = array<i64: 1, 8, 32>}]} {
    %c0 = arith.constant 0 : index
    %c0_0 = arith.constant 0 : index
    %c0_1 = arith.constant 0 : index
    %0 = vector.load %arg2[%c0, %c0_0, %c0_1] : memref<1x8x1xf32, #tpu.memory_space<vmem>>, vector<1x8x1xf32>
    %1 = vector.shape_cast %0 : vector<1x8x1xf32> to vector<8x1xf32>
    %c0_2 = arith.constant 0 : index
    %c0_3 = arith.constant 0 : index
    %2 = vector.load %arg3[%c0_2, %c0_3] : memref<1x32xf32, #tpu.memory_space<vmem>>, vector<1x32xf32>
    %3 = vector.broadcast %1 : vector<8x1xf32> to vector<8x32xf32>
    %4 = vector.broadcast %2 : vector<1x32xf32> to vector<8x32xf32>
    %5 = arith.mulf %3, %4 : vector<8x32xf32>
    %6 = math.cos %5 : vector<8x32xf32>
    %7 = vector.shape_cast %6 : vector<8x32xf32> to vector<1x8x32xf32>
    %c0_4 = arith.constant 0 : index
    %c0_5 = arith.constant 0 : index
    %c0_6 = arith.constant 0 : index
    %8 = vector.load %arg4[%c0_4, %c0_5, %c0_6] : memref<1x8x32xf32, #tpu.memory_space<vmem>>, vector<1x8x32xf32>
    tpu.vector_store %arg4[%c0_4, %c0_5, %c0_6], %7 {strides = array<i32>} : memref<1x8x32xf32, #tpu.memory_space<vmem>>, vector<1x8x32xf32>,
    %9 = math.sin %5 : vector<8x32xf32>
    %10 = vector.shape_cast %9 : vector<8x32xf32> to vector<1x8x32xf32>
    %c0_7 = arith.constant 0 : index
    %c0_8 = arith.constant 0 : index
    %c0_9 = arith.constant 0 : index
    %11 = vector.load %arg5[%c0_7, %c0_8, %c0_9] : memref<1x8x32xf32, #tpu.memory_space<vmem>>, vector<1x8x32xf32>
    tpu.vector_store %arg5[%c0_7, %c0_8, %c0_9], %10 {strides = array<i32>} : memref<1x8x32xf32, #tpu.memory_space<vmem>>, vector<1x8x32xf32>,
    return
  }
  func.func @transform_0(%arg0: i32, %arg1: i32) -> (i32, i32, i32) {
    %c0_i32 = arith.constant 0 : i32
    %c0_i32_0 = arith.constant 0 : i32
    return %arg0, %arg1, %c0_i32 : i32, i32, i32
  }
  func.func @transform_1(%arg0: i32, %arg1: i32) -> (i32, i32) {
    %c0_i32 = arith.constant 0 : i32
    %c0_i32_0 = arith.constant 0 : i32
    %c0_i32_1 = arith.constant 0 : i32
    return %c0_i32, %c0_i32_0 : i32, i32
  }
  func.func @transform_2(%arg0: i32, %arg1: i32) -> (i32, i32, i32) {
    %c0_i32 = arith.constant 0 : i32
    %c0_i32_0 = arith.constant 0 : i32
    return %arg0, %arg1, %c0_i32 : i32, i32, i32
  }
  func.func @transform_3(%arg0: i32, %arg1: i32) -> (i32, i32, i32) {
    %c0_i32 = arith.constant 0 : i32
    %c0_i32_0 = arith.constant 0 : i32
    return %arg0, %arg1, %c0_i32 : i32, i32, i32
  }
}

</mosaic_0001>

<llo_original>
// kernel: tpu_custom_call.1
$region0: #{tpu_custom_call.1}
  #allocation0 [shape = 'u32[]', space=smem, size = 0x4, offset = 0x4, fixed_abs, tag = 'smem constant byte address 0x4 - core index']
  #allocation1 [shape = 'u32[144,128]{1,0:T(1,128)}', space=vmem, size = 0x12000, scoped, tag = 'internal scratch']
  %s0 = inlined_call_operand.vmem [shape: f32[2,8,1], index: 0, kind: input, shape index: {}]
  %s1 = inlined_call_operand.vmem [shape: f32[1,32], index: 1, kind: input, shape index: {}]
  %s2 = inlined_call_operand.hbm [shape: f32[2,8,32], index: 2, kind: output, shape index: {0}]
  %s3 = inlined_call_operand.hbm [shape: f32[2,8,32], index: 3, kind: output, shape index: {1}]
  %4 = xla_tuple %s2, %s3
  %s5 = sld [smem:[#allocation0]]
  $region49: #{tpu_custom_call.1} parent=0
    _
  %s7 = ssub.s32 1, %s5
  %s8 = scalar_select 0, %s7, %s5
  $region1: #{tpu_custom_call.1} parent=0
    #allocation2 [shape = 'u8[8192]{0}', space=vmem, size = 0x2000, scoped, tag = 'output window, operand 0']
    #allocation3 [shape = 's32[2]{0}', space=sflag, size = 0x8, scoped, tag = 'scoped memory for tpu_custom_call.1']
    #allocation4 [shape = 'u8[8192]{0}', space=vmem, size = 0x2000, scoped, tag = 'output window, operand 1']
    #allocation5 [shape = 's32[2]{0}', space=sflag, size = 0x8, scoped, tag = 'scoped memory for tpu_custom_call.1']
    %9 = vsyncpa [#allocation3], 0
    %s10 = scalar_lea.sflag [#allocation3], 1
    %11 = vsyncpa %s10, 0
    %12 = vsyncpa [#allocation5], 0
    %s13 = scalar_lea.sflag [#allocation5], 1
    %14 = vsyncpa %s13, 0
    loop: start=0, step=1, limit=4
    $region2: #{tpu_custom_call.1} parent=1 // loop_pre_header
      _
    $region3: #{tpu_custom_call.1} parent=1 // loop_header
      %s16 = sphi 0, %s20
      %p17 = scmp.ge.s32.totalorder %s16, 4
      %s23 = sphi 0, %s35
      %s24 = sphi 0, %s31
      %s25 = sphi 0, %s23
      %s26 = sphi 0, %s24
      %s27 = sphi 0, %s25
      %s28 = sphi 0, %s26
      %s40 = sphi 0, %s42
      %s43 = sphi 0, %s40
      %s44 = sphi 0, %s43
      %s60 = sphi 0, %s44
      %s64 = sphi 0, %s64
      %s66 = sphi 0, %s64
      %s67 = sphi 0, %s66
      %s81 = sphi 0, %s67
      %s89 = sphi 0, %s91
      %s92 = sphi 0, %s89
      %s93 = sphi 0, %s92
      %s109 = sphi 0, %s93
      %s117 = sphi 0, %s119
      %s120 = sphi 0, %s117
      %s121 = sphi 0, %s120
      %s137 = sphi 0, %s121
    $region4: #{tpu_custom_call.1} parent=1 // loop_header_branch
      %19 = sbr.rel (%p17) target = $region8
    $region5: #{tpu_custom_call.1} parent=1 // loop_body
      %s21 = ssub.s32 %s16, 1
      %s22 = ssub.s32 %s16, 2
      %s29 = sadd.s32 1, %s24
      %p30 = scmp.ge.s32.totalorder %s29, 1
      %s31 = scalar_select %p30, 0, %s29
      %s32 = sadd.s32 1, %s23
      %s33 = scalar_select %p30, %s32, %s23
      %p34 = scmp.ge.s32.totalorder %s33, 2
      %s35 = scalar_select %p34, 0, %s33
      %s36 = ssub.s32 %s23, %s35
      %s37 = ssub.s32 %s24, %s31
      %s38 = sor.u32 %s36, %s37
      %p39 = scmp.eq.s32.totalorder %s38, 0
      %s41 = sadd.s32 %s40, 1
      %s42 = scalar_select %p39, %s40, %s41
      %p45 = pneg %p39
      %p46 = scmp.eq.s32.totalorder %s16, 1
      %p47 = por %p45, %p46
      %p48 = scmp.ne.s32.totalorder %s40, %s43
      %p49 = scmp.eq.s32.totalorder %s16, 0
      %p50 = por %p48, %p49
      %p51 = scmp.ne.s32.totalorder %s40, %s43
      %p52 = scmp.eq.s32.totalorder %s21, 1
      %p53 = por %p51, %p52
      %p54 = scmp.ne.s32.totalorder %s43, %s44
      %p55 = scmp.eq.s32.totalorder %s21, 0
      %p56 = por %p54, %p55
      %p57 = scmp.ne.s32.totalorder %s43, %s44
      %p58 = scmp.eq.s32.totalorder %s22, 1
      %p59 = por %p57, %p58
      %p61 = scmp.ne.s32.totalorder %s44, %s60
      %p62 = scmp.eq.s32.totalorder %s22, 0
      %p63 = por %p61, %p62
      %s65 = sadd.s32 %s64, 1
      %p68 = scmp.eq.s32.totalorder %s16, 1
      %p69 = scmp.ne.s32.totalorder %s64, %s66
      %p70 = scmp.eq.s32.totalorder %s16, 0
      %p71 = por %p69, %p70
      %p72 = scmp.ne.s32.totalorder %s64, %s66
      %p73 = scmp.eq.s32.totalorder %s21, 1
      %p74 = por %p72, %p73
      %p75 = scmp.ne.s32.totalorder %s66, %s67
      %p76 = scmp.eq.s32.totalorder %s21, 0
      %p77 = por %p75, %p76
      %p78 = scmp.ne.s32.totalorder %s66, %s67
      %p79 = scmp.eq.s32.totalorder %s22, 1
      %p80 = por %p78, %p79
      %p82 = scmp.ne.s32.totalorder %s67, %s81
      %p83 = scmp.eq.s32.totalorder %s22, 0
      %p84 = por %p82, %p83
      %s85 = ssub.s32 %s23, %s35
      %s86 = ssub.s32 %s24, %s31
      %s87 = sor.u32 %s85, %s86
      %p88 = scmp.eq.s32.totalorder %s87, 0
      %s90 = sadd.s32 %s89, 1
      %s91 = scalar_select %p88, %s89, %s90
      %p94 = pneg %p88
      %p95 = scmp.eq.s32.totalorder %s16, 1
      %p96 = por %p94, %p95
      %p97 = scmp.ne.s32.totalorder %s89, %s92
      %p98 = scmp.eq.s32.totalorder %s16, 0
      %p99 = por %p97, %p98
      %p100 = scmp.ne.s32.totalorder %s89, %s92
      %p101 = scmp.eq.s32.totalorder %s21, 1
      %p102 = por %p100, %p101
      %p103 = scmp.ne.s32.totalorder %s92, %s93
      %p104 = scmp.eq.s32.totalorder %s21, 0
      %p105 = por %p103, %p104
      %p106 = scmp.ne.s32.totalorder %s92, %s93
      %p107 = scmp.eq.s32.totalorder %s22, 1
      %p108 = por %p106, %p107
      %p110 = scmp.ne.s32.totalorder %s93, %s109
      %p111 = scmp.eq.s32.totalorder %s22, 0
      %p112 = por %p110, %p111
      %s113 = ssub.s32 %s23, %s35
      %s114 = ssub.s32 %s24, %s31
      %s115 = sor.u32 %s113, %s114
      %p116 = scmp.eq.s32.totalorder %s115, 0
      %s118 = sadd.s32 %s117, 1
      %s119 = scalar_select %p116, %s117, %s118
      %p122 = pneg %p116
      %p123 = scmp.eq.s32.totalorder %s16, 1
      %p124 = por %p122, %p123
      %p125 = scmp.ne.s32.totalorder %s117, %s120
      %p126 = scmp.eq.s32.totalorder %s16, 0
      %p127 = por %p125, %p126
      %p128 = scmp.ne.s32.totalorder %s117, %s120
      %p129 = scmp.eq.s32.totalorder %s21, 1
      %p130 = por %p128, %p129
      %p131 = scmp.ne.s32.totalorder %s120, %s121
      %p132 = scmp.eq.s32.totalorder %s21, 0
      %p133 = por %p131, %p132
      %p134 = scmp.ne.s32.totalorder %s120, %s121
      %p135 = scmp.eq.s32.totalorder %s22, 1
      %p136 = por %p134, %p135
      %p138 = scmp.ne.s32.totalorder %s121, %s137
      %p139 = scmp.eq.s32.totalorder %s22, 0
      %p140 = por %p138, %p139
      %p141 = scmp.le.s32.totalorder 1, %s16
      %p142 = scmp.lt.s32.totalorder %s16, 3
      %p143 = pnand %p141, %p142
      %p144 = pneg %p143
      // Predicated region
      $region9: #{tpu_custom_call.1} parent=5 // pred_check
        _
      $region10: #{tpu_custom_call.1} parent=5 // pred_check_branch
        %146 = sbr.rel (%p143) target = $region12
      $region11: #{tpu_custom_call.1} parent=5 // pred_region
        %s147 = ssub.s32 %s16, 1
        // Predicated region
        $region13: #{tpu_custom_call.1} parent=11 // pred_check
          %p148 = pneg %p77
        $region14: #{tpu_custom_call.1} parent=11 // pred_check_branch
          %150 = sbr.rel (%p148) target = $region16
        $region15: #{tpu_custom_call.1} parent=11 // pred_region
          _
        $region16: #{tpu_custom_call.1} parent=11 // pred_fallthru
          _
      $region12: #{tpu_custom_call.1} parent=5 // pred_fallthru
        _
      %p151 = scmp.lt.s32.totalorder %s16, 2
      // Predicated region
      $region17: #{tpu_custom_call.1} parent=5 // pred_check
        %p152 = pneg %p151
      $region18: #{tpu_custom_call.1} parent=5 // pred_check_branch
        %154 = sbr.rel (%p152) target = $region20
      $region19: #{tpu_custom_call.1} parent=5 // pred_region
        // Predicated region
        $region21: #{tpu_custom_call.1} parent=19 // pred_check
          %p155 = pneg %p50
        $region22: #{tpu_custom_call.1} parent=19 // pred_check_branch
          %157 = sbr.rel (%p155) target = $region24
        $region23: #{tpu_custom_call.1} parent=19 // pred_region
          %p158 = scmp.lt.s32.totalorder %s23, 1
          %s159 = scalar_select %p158, %s23, 1
          %p160 = scmp.lt.s32.totalorder %s24, 0
          %s161 = scalar_select %p160, %s24, 0
          %s162 = sadd.s32 %s161, %s159
          %s163 = smul.addr %s162, 8
          %s164 = scalar_lea.vmem %s0, %s163
        $region24: #{tpu_custom_call.1} parent=19 // pred_fallthru
          _
      $region20: #{tpu_custom_call.1} parent=5 // pred_fallthru
        _
      %p165 = scmp.le.s32.totalorder 1, %s16
      %p166 = scmp.lt.s32.totalorder %s16, 3
      %p167 = pnand %p165, %p166
      %p168 = pneg %p167
      // Predicated region
      $region25: #{tpu_custom_call.1} parent=5 // pred_check
        _
      $region26: #{tpu_custom_call.1} parent=5 // pred_check_branch
        %170 = sbr.rel (%p167) target = $region28
      $region27: #{tpu_custom_call.1} parent=5 // pred_region
        %s171 = ssub.s32 %s16, 1
        %p172 = scmp.lt.s32.totalorder %s25, 1
        %s173 = scalar_select %p172, %s25, 1
        %p174 = scmp.lt.s32.totalorder %s26, 0
        %s175 = scalar_select %p174, %s26, 0
        %s176 = sadd.s32 %s175, %s173
        %s177 = smul.addr %s176, 8
        %s178 = scalar_lea.vmem %s0, %s177
        %p179 = pneg %p56
        %p180 = pneg %p53
        %p181 = pneg %p77
        %p182 = pneg %p74
        %p183 = pneg %p105
        %p184 = pneg %p102
        %s185 = sand.u32 %s92, 1
        %s186 = scalar_lea.sflag [#allocation3], %s185
        %s187 = sand.u32 %s92, 1
        %s188 = smul.addr %s187, 8
        %s189 = scalar_lea.vmem [#allocation2], %s188
        %p190 = pneg %p133
        %p191 = pneg %p130
        %s192 = sand.u32 %s120, 1
        %s193 = scalar_lea.sflag [#allocation5], %s192
        %s194 = sand.u32 %s120, 1
        %s195 = smul.addr %s194, 8
        %s196 = scalar_lea.vmem [#allocation4], %s195
        %p197 = scmp.lt.s32.totalorder %s25, 1
        %s198 = scalar_select %p197, %s25, 1
        %p199 = scmp.lt.s32.totalorder %s26, 0
        %s200 = scalar_select %p199, %s26, 0
        %s201 = sadd.s32 %s200, %s198
        %s202 = smul.addr %s201, 8
        %s203 = scalar_lea.vmem %s0, %s202
        %v204 = vld [vmem:[%s203] sm:$0xff]
        %v205 = vld [vmem:[%s1] sm:$0x1]
        %207 = vset.pattern.permute.xlu0 0
        %208 = vperm.xlu0 %207, %v204
        %v209 = vpop.permute.xlu0 %208
        %v212 = vlaneseq
        %v213 = vshrl.u32 %v212, 7
        %v214 = vsub.s32 0, %v213
        %v215 = vrot.slane %v205, %v214
        %v217 = vmul.f32 %v209, %v215
        %v218 = vand.u32 2147483647, %v217
        %vm219 = vcmp.le.f32.partialorder %v218, 0.7853982
        %vm220 = vcmp.lt.s32.totalorder %v217, 0
        %v221 = vand.u32 %v217, 2139095040
        %v222 = vshrl.u32 %v221, 23
        %v223 = vsub.s32 %v222, 127
        %v224 = vand.u32 2147483647, %v217
        %v225 = vand.u32 %v224, 8388607
        %v226 = vor.u32 %v225, 8388608
        %v227 = vsub.s32 0, %v226
        %v228 = vadd.s32 %v223, 1
        %vm229 = vcmp.gt.s32.totalorder %v228, 0
        %v230 = vsel %vm229, %v228, 0
        %v231 = vshrl.u32 %v230, 5
        %v232 = vand.u32 %v230, 31
        %v233 = vsub.s32 32, %v232
        %v234 = vshrl.u32 683565275, %v233
        %v235 = vshll.u32 683565275, %v232
        %v236 = vshrl.u32 2475754826, %v233
        %v237 = vor.u32 %v235, %v236
        %v238 = vshll.u32 2475754826, %v232
        %v239 = vshrl.u32 2131351028, %v233
        %v240 = vor.u32 %v238, %v239
        %v241 = vshll.u32 2131351028, %v232
        %v242 = vshrl.u32 2102212464, %v233
        %v243 = vor.u32 %v241, %v242
        %v244 = vshll.u32 2102212464, %v232
        %v245 = vshrl.u32 920167782, %v233
        %v246 = vor.u32 %v244, %v245
        %v247 = vshll.u32 920167782, %v232
        %v248 = vshrl.u32 1326507024, %v233
        %v249 = vor.u32 %v247, %v248
        %vm250 = vcmp.lt.s32.totalorder %v231, 1
        %vm251 = vcmp.lt.s32.totalorder %v231, 2
        %vm252 = vcmp.lt.s32.totalorder %v231, 3
        %vm253 = vcmp.lt.s32.totalorder %v231, 4
        %v254 = vsel %vm250, %v234, %v237
        %v255 = vsel %vm253, %v243, 2102212464
        %v256 = vsel %vm252, %v240, %v255
        %v257 = vsel %vm251, %v254, %v256
        %v258 = vsel %vm250, %v237, %v240
        %v259 = vsel %vm253, %v246, 920167782
        %v260 = vsel %vm252, %v243, %v259
        %v261 = vsel %vm251, %v258, %v260
        %v262 = vsel %vm250, %v240, %v243
        %v263 = vsel %vm253, %v249, 1326507024
        %v264 = vsel %vm252, %v246, %v263
        %v265 = vsel %vm251, %v262, %v264
        %v266 = vshll.u32 %v226, 8
        %v267 = vmul.u32.u64.compose %v266, %v265
        %v268 = vextract.low.u32 %v267
        %v269 = vextract.high.u32 %v267
        %v270 = vmul.u32.u64.compose %v266, %v261
        %v271 = vextract.low.u32 %v270
        %v272 = vextract.high.u32 %v270
        %v273 = vmul.u32 %v266, %v257
        %v274 = vadd.s32 %v269, %v271
        %vm275 = vc.u32 %v269, %v271
        %v276 = vadd.s32 %v272, 1
        %v277 = vsel %vm275, %v276, %v272
        %v278 = vadd.s32 %v273, %v277
        %v279 = vadd.s32 %v278, 536870912
        %v280 = vshrl.u32 %v279, 30
        %v281 = vshll.u32 %v280, 30
        %v282 = vsub.s32 %v278, %v281
        %vm283 = vcmp.lt.s32.totalorder %v282, 0
        %v284 = vsub.s32 0, %v282
        %v285 = vsel %vm283, %v284, %v282
        %v286 = vclz %v285
        %v287 = vsub.s32 %v286, 2
        %vm288 = vcmp.gt.s32.totalorder 0, %v287
        %v289 = vsel %vm288, 0, %v287
        %v290 = vsub.s32 32, %v289
        %v291 = vshll.u32 %v282, %v289
        %v292 = vshrl.u32 %v274, %v290
        %v293 = vor.u32 %v291, %v292
        %v294 = vsub.s32 4294967266, %v289
        %v295 = vadd.s32 %v294, 127
        %v296 = vshll.u32 %v295, 23
        %v297 = vor.u32 4788187, %v296
        %v298 = vand.u32 2147483647, %v297
        %v300 = vcvt.s32.f32 %v293
        %v301 = vmul.f32 %v300, %v298
        %v302 = vxor.u32 %v301, 2147483648
        %v303 = vsel %vm220, %v302, %v301
        %v304 = vsub.s32 4, %v280
        %v305 = vsel %vm220, %v304, %v280
        %v306 = vsel %vm219, %v217, %v303
        %v307 = vsel %vm219, 0, %v305
        %v308 = vcosq.f32.pop %v306
        %v309 = vsinq.f32.pop %v306
        %vm310 = vweird.f32 %v217
        %v311 = vand.u32 %v307, 3
        %vm312 = vcmp.lt.s32.totalorder %v311, 2
        %vm313 = vcmp.eq.s32.totalorder %v311, 0
        %v314 = vxor.u32 %v309, 2147483648
        %v315 = vsel %vm313, %v308, %v314
        %vm316 = vcmp.eq.s32.totalorder %v311, 2
        %v317 = vxor.u32 %v308, 2147483648
        %v318 = vsel %vm316, %v317, %v309
        %v319 = vsel %vm312, %v315, %v318
        %v320 = vsel %vm310, nan, %v319
        %vm321 = vcmask 261120
        %322 = vst.msk [vmem:[%s189] sm:$0xff] %vm321, %v320
        %v323 = vand.u32 2147483647, %v217
        %vm324 = vcmp.le.f32.partialorder %v323, 0.7853982
        %vm325 = vcmp.lt.s32.totalorder %v217, 0
        %v326 = vand.u32 %v217, 2139095040
        %v327 = vshrl.u32 %v326, 23
        %v328 = vsub.s32 %v327, 127
        %v329 = vand.u32 2147483647, %v217
        %v330 = vand.u32 %v329, 8388607
        %v331 = vor.u32 %v330, 8388608
        %v332 = vsub.s32 0, %v331
        %v333 = vadd.s32 %v328, 1
        %vm334 = vcmp.gt.s32.totalorder %v333, 0
        %v335 = vsel %vm334, %v333, 0
        %v336 = vshrl.u32 %v335, 5
        %v337 = vand.u32 %v335, 31
        %v338 = vsub.s32 32, %v337
        %v339 = vshrl.u32 683565275, %v338
        %v340 = vshll.u32 683565275, %v337
        %v341 = vshrl.u32 2475754826, %v338
        %v342 = vor.u32 %v340, %v341
        %v343 = vshll.u32 2475754826, %v337
        %v344 = vshrl.u32 2131351028, %v338
        %v345 = vor.u32 %v343, %v344
        %v346 = vshll.u32 2131351028, %v337
        %v347 = vshrl.u32 2102212464, %v338
        %v348 = vor.u32 %v346, %v347
        %v349 = vshll.u32 2102212464, %v337
        %v350 = vshrl.u32 920167782, %v338
        %v351 = vor.u32 %v349, %v350
        %v352 = vshll.u32 920167782, %v337
        %v353 = vshrl.u32 1326507024, %v338
        %v354 = vor.u32 %v352, %v353
        %vm355 = vcmp.lt.s32.totalorder %v336, 1
        %vm356 = vcmp.lt.s32.totalorder %v336, 2
        %vm357 = vcmp.lt.s32.totalorder %v336, 3
        %vm358 = vcmp.lt.s32.totalorder %v336, 4
        %v359 = vsel %vm355, %v339, %v342
        %v360 = vsel %vm358, %v348, 2102212464
        %v361 = vsel %vm357, %v345, %v360
        %v362 = vsel %vm356, %v359, %v361
        %v363 = vsel %vm355, %v342, %v345
        %v364 = vsel %vm358, %v351, 920167782
        %v365 = vsel %vm357, %v348, %v364
        %v366 = vsel %vm356, %v363, %v365
        %v367 = vsel %vm355, %v345, %v348
        %v368 = vsel %vm358, %v354, 1326507024
        %v369 = vsel %vm357, %v351, %v368
        %v370 = vsel %vm356, %v367, %v369
        %v371 = vshll.u32 %v331, 8
        %v372 = vmul.u32.u64.compose %v371, %v370
        %v373 = vextract.low.u32 %v372
        %v374 = vextract.high.u32 %v372
        %v375 = vmul.u32.u64.compose %v371, %v366
        %v376 = vextract.low.u32 %v375
        %v377 = vextract.high.u32 %v375
        %v378 = vmul.u32 %v371, %v362
        %v379 = vadd.s32 %v374, %v376
        %vm380 = vc.u32 %v374, %v376
        %v381 = vadd.s32 %v377, 1
        %v382 = vsel %vm380, %v381, %v377
        %v383 = vadd.s32 %v378, %v382
        %v384 = vadd.s32 %v383, 536870912
        %v385 = vshrl.u32 %v384, 30
        %v386 = vshll.u32 %v385, 30
        %v387 = vsub.s32 %v383, %v386
        %vm388 = vcmp.lt.s32.totalorder %v387, 0
        %v389 = vsub.s32 0, %v387
        %v390 = vsel %vm388, %v389, %v387
        %v391 = vclz %v390
        %v392 = vsub.s32 %v391, 2
        %vm393 = vcmp.gt.s32.totalorder 0, %v392
        %v394 = vsel %vm393, 0, %v392
        %v395 = vsub.s32 32, %v394
        %v396 = vshll.u32 %v387, %v394
        %v397 = vshrl.u32 %v379, %v395
        %v398 = vor.u32 %v396, %v397
        %v399 = vsub.s32 4294967266, %v394
        %v400 = vadd.s32 %v399, 127
        %v401 = vshll.u32 %v400, 23
        %v402 = vor.u32 4788187, %v401
        %v403 = vand.u32 2147483647, %v402
        %v405 = vcvt.s32.f32 %v398
        %v406 = vmul.f32 %v405, %v403
        %v407 = vxor.u32 %v406, 2147483648
        %v408 = vsel %vm325, %v407, %v406
        %v409 = vsub.s32 4, %v385
        %v410 = vsel %vm325, %v409, %v385
        %v411 = vsel %vm324, %v217, %v408
        %v412 = vsel %vm324, 0, %v410
        %v413 = vcosq.f32.pop %v411
        %v414 = vsinq.f32.pop %v411
        %vm415 = vweird.f32 %v217
        %v416 = vadd.s32 %v412, 3
        %v417 = vand.u32 %v416, 3
        %vm418 = vcmp.lt.s32.totalorder %v417, 2
        %vm419 = vcmp.eq.s32.totalorder %v417, 0
        %v420 = vxor.u32 %v414, 2147483648
        %v421 = vsel %vm419, %v413, %v420
        %vm422 = vcmp.eq.s32.totalorder %v417, 2
        %v423 = vxor.u32 %v413, 2147483648
        %v424 = vsel %vm422, %v423, %v414
        %v425 = vsel %vm418, %v421, %v424
        %v426 = vsel %vm415, nan, %v425
        %427 = vst.msk [vmem:[%s196] sm:$0xff] %vm321, %v426
        %s428 = sand.u32 %s92, 1
        %s429 = scalar_lea.sflag [#allocation3], %s428
        %s430 = sand.u32 %s92, 1
        %s431 = smul.addr %s430, 8
        %s432 = scalar_lea.vmem [#allocation2], %s431
        %s433 = sand.u32 %s120, 1
        %s434 = scalar_lea.sflag [#allocation5], %s433
        %s435 = sand.u32 %s120, 1
        %s436 = smul.addr %s435, 8
        %s437 = scalar_lea.vmem [#allocation4], %s436
        // Predicated region
        $region29: #{tpu_custom_call.1} parent=27 // pred_check
          %p438 = pneg %p102
        $region30: #{tpu_custom_call.1} parent=27 // pred_check_branch
          %440 = sbr.rel (%p438) target = $region32
        $region31: #{tpu_custom_call.1} parent=27 // pred_region
          %s442 = ssub.s32 128, 128
          %443 = vsyncadd %s429, %s442
          %s444 = sadd.s32 %s26, %s25
          %s445 = smul.addr %s444, 128
          %s446 = scalar_lea.hbm %s2, %s445
          %s448 = sshll.u32 %s432, 4
          %s449 = int_to_ptr.vmem [resolvable:$true] %s448
          %451 = dma.vmem_to_hbm [thread:$0]  %s449, 128, %s446, %s429
        $region32: #{tpu_custom_call.1} parent=27 // pred_fallthru
          _
        // Predicated region
        $region33: #{tpu_custom_call.1} parent=27 // pred_check
          %p452 = pneg %p130
        $region34: #{tpu_custom_call.1} parent=27 // pred_check_branch
          %454 = sbr.rel (%p452) target = $region36
        $region35: #{tpu_custom_call.1} parent=27 // pred_region
          %s456 = ssub.s32 128, 128
          %457 = vsyncadd %s434, %s456
          %s458 = sadd.s32 %s26, %s25
          %s459 = smul.addr %s458, 128
          %s460 = scalar_lea.hbm %s3, %s459
          %s462 = sshll.u32 %s437, 4
          %s463 = int_to_ptr.vmem [resolvable:$true] %s462
          %465 = dma.vmem_to_hbm [thread:$0]  %s463, 128, %s460, %s434
        $region36: #{tpu_custom_call.1} parent=27 // pred_fallthru
          _
      $region28: #{tpu_custom_call.1} parent=5 // pred_fallthru
        _
      %p466 = scmp.le.s32.totalorder 2, %s16
      // Predicated region
      $region37: #{tpu_custom_call.1} parent=5 // pred_check
        %p467 = pneg %p466
      $region38: #{tpu_custom_call.1} parent=5 // pred_check_branch
        %469 = sbr.rel (%p467) target = $region40
      $region39: #{tpu_custom_call.1} parent=5 // pred_region
        %s470 = ssub.s32 %s16, 2
        // Predicated region
        $region41: #{tpu_custom_call.1} parent=39 // pred_check
          %p471 = pneg %p108
        $region42: #{tpu_custom_call.1} parent=39 // pred_check_branch
          %473 = sbr.rel (%p471) target = $region44
        $region43: #{tpu_custom_call.1} parent=39 // pred_region
          %s474 = sand.u32 %s93, 1
          %s475 = scalar_lea.sflag [#allocation3], %s474
          %s476 = sand.u32 %s93, 1
          %s477 = smul.addr %s476, 8
          %s478 = scalar_lea.vmem [#allocation2], %s477
          %479 = dma.done %s475, 128
        $region44: #{tpu_custom_call.1} parent=39 // pred_fallthru
          _
        // Predicated region
        $region45: #{tpu_custom_call.1} parent=39 // pred_check
          %p480 = pneg %p136
        $region46: #{tpu_custom_call.1} parent=39 // pred_check_branch
          %482 = sbr.rel (%p480) target = $region48
        $region47: #{tpu_custom_call.1} parent=39 // pred_region
          %s483 = sand.u32 %s121, 1
          %s484 = scalar_lea.sflag [#allocation5], %s483
          %s485 = sand.u32 %s121, 1
          %s486 = smul.addr %s485, 8
          %s487 = scalar_lea.vmem [#allocation4], %s486
          %488 = dma.done %s484, 128
        $region48: #{tpu_custom_call.1} parent=39 // pred_fallthru
          _
      $region40: #{tpu_custom_call.1} parent=5 // pred_fallthru
        _
    $region6: #{tpu_custom_call.1} parent=1 // loop_footer
      %s20 = sadd.s32 1, %s16
    $region7: #{tpu_custom_call.1} parent=1 // loop_footer_branch
      %15 = sbr.rel target = $region3
    $region8: #{tpu_custom_call.1} parent=1 // loop_exit
      _
    %489 = vsyncpa [#allocation3], 1
    %s490 = scalar_lea.sflag [#allocation3], 1
    %491 = vsyncpa %s490, 1
    %492 = vsyncpa [#allocation5], 1
    %s493 = scalar_lea.sflag [#allocation5], 1
    %494 = vsyncpa %s493, 1

</llo_original>
